<compile_context>
chip_gen: v7x
topology: tpu7x:2x2x1
jax: 0.10.0
libtpu: 0.0.40
codegen_flags: <defaults>
</compile_context>

<pallas_src>
import math

import jax
import jax.numpy as jnp
from jax import lax
from jax.experimental import pallas as pl
from jax.experimental.pallas import tpu as pltpu


_N_SLAB = 256  # column-slab width for the tanh epilogue (bounds `h` live range)


def _round_up(x, m):
    return (x + m - 1) // m * m


def _vmem_capacity_bytes():
    """Per-core VMEM capacity; conservative v7x default if the query fails."""
    try:
        return int(pltpu.get_tpu_info().vmem_capacity_bytes)
    except Exception:
        return 64 * 1024 * 1024


def _const_spec(block_shape):
    """BlockSpec for a grid-invariant operand: constant index_map, 1 buffer."""
    index_map = lambda *_: (0,) * len(block_shape)
    try:
        return pl.BlockSpec(block_shape, index_map, pipeline_mode=pl.Buffered(1))
    except Exception:  # older jax without pipeline_mode / Buffered(1)
        return pl.BlockSpec(block_shape, index_map)


def _scores_f32(x, w1_ref, b1_ref, w2_ref, b2, n_slab):
    """sigmoid-less scorer: tanh(x @ W1 + b1) . w2 + b2 -> (rows, 1) f32.

    Chunked over `n_slab` output columns of W1 so the intermediate `h` slab
    stays small (spill relief); the N=1 projection is a VPU multiply + XLU
    lane reduce rather than an MXU matmul.
    """
    rows = x.shape[0]
    hk = w1_ref.shape[1]
    sc = jnp.full((rows, 1), b2, dtype=jnp.float32)
    for c0 in range(0, hk, n_slab):
        c1 = min(c0 + n_slab, hk)
        h = jnp.tanh(
            jnp.dot(x, w1_ref[:, c0:c1], preferred_element_type=jnp.float32)
            + b1_ref[:, c0:c1]
        )
        sc = sc + jnp.sum(h * w2_ref[:, c0:c1], axis=-1, keepdims=True)
    return sc


def _apply_scale(x, scale_f32, out_dtype):
    """x * scale with the big (rows, Hp) multiply in x's native dtype."""
    if x.dtype == jnp.float32:
        return (x * scale_f32).astype(out_dtype)
    return (x * scale_f32.astype(x.dtype)).astype(out_dtype)


# ---------------------------------------------------------------------------
# Fused single-pass kernel: one grid step per batch, x read once from HBM.
# ---------------------------------------------------------------------------
def _fused_forward(x_p, w1_p, b1_p, w2_p, b2_s, *, S, cS, n_slab, mm_dtype,
                   approx, vmem_limit):
    B, S_pad, Hp = x_p.shape
    x_dtype = x_p.dtype
    nC = S_pad // cS
    seq_padded = S_pad != S
    unroll = nC <= 4

    def kernel(x_ref, w1_ref, b1_ref, w2_ref, b2_ref, o_ref, a_sc):
        def score_chunk(c, acc):
            start = pl.multiple_of(c * cS, cS)
            x = x_ref[0, pl.ds(start, cS), :]
            xm = x if x.dtype == mm_dtype else x.astype(mm_dtype)
            sc = _scores_f32(xm, w1_ref, b1_ref, w2_ref, b2_ref[0], n_slab)
            a = jax.nn.sigmoid(sc)                                  # (cS, 1)
            if seq_padded:
                row = start + lax.broadcasted_iota(jnp.int32, (cS, 1), 0)
                a = jnp.where(row < S, a, 0.0)
            a_sc[pl.ds(start, cS), :] = a
            return acc + jnp.sum(a)

        denom = lax.fori_loop(0, nC, score_chunk,
                              jnp.zeros((1, 1), jnp.float32), unroll=unroll)
        if approx:
            inv = pl.reciprocal(denom, approx=True)                 # EUP
        else:
            inv = 1.0 / denom

        def apply_chunk(c, carry):
            start = pl.multiple_of(c * cS, cS)
            scale = a_sc[pl.ds(start, cS), :] * inv                 # (cS, 1) f32
            x = x_ref[0, pl.ds(start, cS), :]
            o_ref[0, pl.ds(start, cS), :] = _apply_scale(x, scale, o_ref.dtype)
            return carry

        lax.fori_loop(0, nC, apply_chunk, 0, unroll=unroll)

    return pl.pallas_call(
        kernel,
        out_shape=jax.ShapeDtypeStruct((B, S_pad, Hp), x_dtype),
        grid=(B,),
        in_specs=[
            pl.BlockSpec((1, S_pad, Hp), lambda b: (b, 0, 0)),      # x (per batch)
            _const_spec((Hp, Hp)),                                  # W1^T, 1 buffer
            _const_spec((1, Hp)),                                   # b1
            _const_spec((1, Hp)),                                   # w2 row
            pl.BlockSpec(memory_space=pltpu.MemorySpace.SMEM),      # b2 scalar
        ],
        out_specs=pl.BlockSpec((1, S_pad, Hp), lambda b: (b, 0, 0)),
        scratch_shapes=[pltpu.VMEM((S_pad, 1), jnp.float32)],       # a_tilde
        compiler_params=pltpu.CompilerParams(
            dimension_semantics=("parallel",),
            vmem_limit_bytes=vmem_limit),
    )(x_p, w1_p, b1_p, w2_p, b2_s)


# ---------------------------------------------------------------------------
# Two-pass fallback for sequences too long to keep resident in VMEM.
# ---------------------------------------------------------------------------
def _two_pass_forward(x_p, w1_p, b1_p, w2_p, b2_s, *, S, tS1, tS2, n_slab,
                      mm_dtype, approx, vmem_limit):
    B, S_pad, Hp = x_p.shape
    x_dtype = x_p.dtype
    nS1, nS2 = S_pad // tS1, S_pad // tS2
    seq_padded = S_pad != S

    # ---- pass 1: scores + per-batch denominator (output-resident acc) ----
    def scores_kernel(x_ref, w1_ref, b1_ref, w2_ref, b2_ref, a_ref, denom_ref):
        s_idx = pl.program_id(1)
        x = x_ref[0]                                                # (tS1, Hp)
        xm = x if x.dtype == mm_dtype else x.astype(mm_dtype)
        sc = _scores_f32(xm, w1_ref, b1_ref, w2_ref, b2_ref[0], n_slab)
        a = jax.nn.sigmoid(sc)                                      # (tS1, 1)
        if seq_padded:
            row = s_idx * tS1 + lax.broadcasted_iota(jnp.int32, (tS1, 1), 0)
            a = jnp.where(row < S, a, 0.0)
        a_ref[0] = a

        @pl.when(s_idx == 0)
        def _():
            denom_ref[...] = jnp.zeros_like(denom_ref)

        denom_ref[...] = denom_ref[...] + jnp.sum(a)

    a_tilde, denom = pl.pallas_call(
        scores_kernel,
        out_shape=(
            jax.ShapeDtypeStruct((B, S_pad, 1), jnp.float32),
            jax.ShapeDtypeStruct((B, 1, 1), jnp.float32),
        ),
        grid=(B, nS1),
        in_specs=[
            pl.BlockSpec((1, tS1, Hp), lambda b, s: (b, s, 0)),
            _const_spec((Hp, Hp)),
            _const_spec((1, Hp)),
            _const_spec((1, Hp)),
            pl.BlockSpec(memory_space=pltpu.MemorySpace.SMEM),
        ],
        out_specs=(
            pl.BlockSpec((1, tS1, 1), lambda b, s: (b, s, 0)),
            pl.BlockSpec((1, 1, 1), lambda b, s: (b, 0, 0)),
        ),
        compiler_params=pltpu.CompilerParams(
            dimension_semantics=("parallel", "arbitrary"),
            vmem_limit_bytes=vmem_limit),
    )(x_p, w1_p, b1_p, w2_p, b2_s)

    # ---- pass 2: normalize & apply (fully parallel, lane-dense stores) ---
    def apply_kernel(x_ref, a_ref, denom_ref, o_ref):
        if approx:
            inv = pl.reciprocal(denom_ref[0], approx=True)          # (1, 1) EUP
        else:
            inv = 1.0 / denom_ref[0]
        scale = a_ref[0] * inv                                      # (tS2, 1) f32
        o_ref[0] = _apply_scale(x_ref[0], scale, o_ref.dtype)

    out_p = pl.pallas_call(
        apply_kernel,
        out_shape=jax.ShapeDtypeStruct((B, S_pad, Hp), x_dtype),
        grid=(B, nS2),
        in_specs=[
            pl.BlockSpec((1, tS2, Hp), lambda b, s: (b, s, 0)),
            pl.BlockSpec((1, tS2, 1), lambda b, s: (b, s, 0)),
            pl.BlockSpec((1, 1, 1), lambda b, s: (b, 0, 0)),
        ],
        out_specs=pl.BlockSpec((1, tS2, Hp), lambda b, s: (b, s, 0)),
        compiler_params=pltpu.CompilerParams(
            dimension_semantics=("parallel", "parallel"),
            vmem_limit_bytes=vmem_limit),
    )(x_p, a_tilde, denom)
    return out_p


# ---------------------------------------------------------------------------
# Public wrapper.
# ---------------------------------------------------------------------------
def soft_attention(memory_bank, w1, b1, w2, b2, *,
                   use_bf16_matmul=False, approx_reciprocal=True):
    """memory_bank: (B, S, H); torch Linear params: w1 (H, H) [(out, in)],
    b1 (H,), w2 (1, H), b2 (1,). Returns (B, S, H) = memory_bank * a_norm."""
    B, S, H = memory_bank.shape
    x_dtype = memory_bank.dtype
    xb = jnp.dtype(x_dtype).itemsize

    Hp = _round_up(H, 128)                       # lane-dense hidden

    mm_dtype = x_dtype
    if use_bf16_matmul and x_dtype == jnp.float32:
        mm_dtype = jnp.bfloat16                  # bf16-native MXU, f32 accumulate
    wb = jnp.dtype(mm_dtype).itemsize

    # torch Linear: y = x @ W1.T + b1  ->  pre-transpose so kernel does x @ W.
    w1_p = jnp.pad(jnp.asarray(w1).T, ((0, Hp - H), (0, Hp - H))).astype(mm_dtype)
    b1_p = jnp.pad(jnp.asarray(b1).reshape(1, H).astype(jnp.float32),
                   ((0, 0), (0, Hp - H)))
    w2_p = jnp.pad(jnp.asarray(w2).reshape(1, H).astype(jnp.float32),
                   ((0, 0), (0, Hp - H)))
    b2_s = jnp.asarray(b2).reshape(1).astype(jnp.float32)

    vmem_cap = _vmem_capacity_bytes()

    def pad_bytes(n_sub, n_lane, itemsize):      # VMEM footprint of one buffer
        return (_round_up(max(n_sub, 8), 8)
                * _round_up(max(n_lane, 128), 128) * itemsize)

    const_bytes = pad_bytes(Hp, Hp, wb) + 2 * pad_bytes(1, Hp, 4)  # W1 + b1 + w2

    # ---- fused single-pass path (x streamed from HBM exactly once) -------
    cS = _round_up(S, 8) if S <= 256 else 256
    S_pad_f = _round_up(S, cS)
    fused_bytes = (4 * pad_bytes(S_pad_f, Hp, xb)      # x + out, double-buffered
                   + const_bytes                        # single-buffered consts
                   + pad_bytes(S_pad_f, 1, 4))          # a_tilde scratch

    if fused_bytes <= int(0.55 * vmem_cap):
        vmem_limit = int(min(0.85 * vmem_cap, max(32 << 20, 1.35 * fused_bytes)))
        x_p = jnp.pad(memory_bank, ((0, 0), (0, S_pad_f - S), (0, Hp - H)))
        out_p = _fused_forward(x_p, w1_p, b1_p, w2_p, b2_s, S=S, cS=cS,
                               n_slab=_N_SLAB, mm_dtype=mm_dtype,
                               approx=approx_reciprocal, vmem_limit=vmem_limit)
        return out_p[:, :S, :H]

    # ---- two-pass fallback for very long sequences -----------------------
    def pass1_bytes(t):
        return 2 * pad_bytes(t, Hp, xb) + 2 * pad_bytes(t, 1, 4) + const_bytes

    tS2 = 512                                        # streaming pass: big tiles
    tS1 = 512 if pass1_bytes(512) <= int(0.55 * vmem_cap) else 256
    S_pad = _round_up(S, max(tS1, tS2))
    pass2_bytes = (4 * pad_bytes(tS2, Hp, xb) + 2 * pad_bytes(tS2, 1, 4)
                   + 2 * pad_bytes(1, 1, 4))
    budget = max(pass1_bytes(tS1), pass2_bytes)
    vmem_limit = int(min(0.85 * vmem_cap, max(32 << 20, 1.35 * budget)))

    x_p = jnp.pad(memory_bank, ((0, 0), (0, S_pad - S), (0, Hp - H)))
    out_p = _two_pass_forward(x_p, w1_p, b1_p, w2_p, b2_s, S=S, tS1=tS1,
                              tS2=tS2, n_slab=_N_SLAB, mm_dtype=mm_dtype,
                              approx=approx_reciprocal, vmem_limit=vmem_limit)
    return out_p[:, :S, :H]


def soft_attention_ref(memory_bank, w1, b1, w2, b2):
    """Pure-JAX reference mirroring the PyTorch forward (mask=None)."""
    h = jnp.tanh(jnp.einsum("bsh,oh->bso", memory_bank, w1) + b1)
    a_tilde = jax.nn.sigmoid(jnp.einsum("bsh,oh->bso", h, w2) + b2)   # (B, S, 1)
    a_norm = a_tilde / a_tilde.sum(axis=1)[:, None, :]                # sum over seq
    return memory_bank * a_norm


if __name__ == "__main__":
    B, S, H = 2, 8, 32
    key = jax.random.PRNGKey(0)
    k_x, k_w1, k_b1, k_w2, k_b2, k_x2 = jax.random.split(key, 6)

    # Deterministic synthetic params (torch Linear shapes: weight = (out, in)).
    bound = 1.0 / math.sqrt(H)
    w1 = jax.random.uniform(k_w1, (H, H), minval=-bound, maxval=bound,
                            dtype=jnp.float32)
    b1 = jax.random.uniform(k_b1, (H,), minval=-bound, maxval=bound,
                            dtype=jnp.float32)
    w2 = jax.random.uniform(k_w2, (1, H), minval=-bound, maxval=bound,
                            dtype=jnp.float32)
    b2 = jax.random.uniform(k_b2, (1,), minval=-bound, maxval=bound,
                            dtype=jnp.float32)

    # Small case (single chunk, no sequence padding).
    memory_bank = jax.random.normal(k_x, (B, S, H), dtype=jnp.float32)
    out = jax.block_until_ready(soft_attention(memory_bank, w1, b1, w2, b2))
    ref = soft_attention_ref(memory_bank, w1, b1, w2, b2)
    assert out.shape == (B, S, H)
    # approx reciprocal (EUP) loosens tolerance slightly vs an exact divide.
    assert jnp.allclose(out, ref, atol=2e-3, rtol=2e-3), "mismatch (small case)"

    # Exercise the fused kernel's multi-chunk loop + padded-row masking.
    S2 = 300
    memory_bank2 = jax.random.normal(k_x2, (B, S2, H), dtype=jnp.float32)
    out2 = jax.block_until_ready(soft_attention(memory_bank2, w1, b1, w2, b2))
    ref2 = soft_attention_ref(memory_bank2, w1, b1, w2, b2)
    assert out2.shape == (B, S2, H)
    assert jnp.allclose(out2, ref2, atol=2e-3, rtol=2e-3), "mismatch (chunked case)"

    print("KERNEL_OK")
</pallas_src>

<mosaic_0001>
module attributes {stable_mosaic.version = 11 : i64} {
  func.func @kernel(%arg0: i32, %arg1: memref<1x8x128xf32, #tpu.memory_space<vmem>>, %arg2: memref<128x128xf32, #tpu.memory_space<vmem>>, %arg3: memref<1x128xf32, #tpu.memory_space<vmem>>, %arg4: memref<1x128xf32, #tpu.memory_space<vmem>>, %arg5: memref<1xf32, #tpu.memory_space<smem>>, %arg6: memref<1x8x128xf32, #tpu.memory_space<vmem>>, %arg7: memref<8x1xf32, #tpu.memory_space<vmem>>) attributes {dimension_semantics = [#tpu.dimension_semantics<parallel>], iteration_bounds = array<i64: 2>, scalar_prefetch = 0 : i64, scratch_operands = 1 : i64, tpu.core_type = #tpu.core_type<tc>, window_params = [{transform_indices = @transform_0, window_bounds = array<i64: 1, 8, 128>}, {pipeline_mode = #tpu.pipeline_mode<synchronous>, transform_indices = @transform_1, window_bounds = array<i64: 128, 128>}, {pipeline_mode = #tpu.pipeline_mode<synchronous>, transform_indices = @transform_2, window_bounds = array<i64: 1, 128>}, {pipeline_mode = #tpu.pipeline_mode<synchronous>, transform_indices = @transform_3, window_bounds = array<i64: 1, 128>}, {transform_indices = @transform_4, window_bounds = array<i64: 1>}, {transform_indices = @transform_5, window_bounds = array<i64: 1, 8, 128>}]} {
    %cst = arith.constant 0.000000e+00 : f32
    %0 = vector.broadcast %cst : f32 to vector<1x1xf32>
    %c0_i32 = arith.constant 0 : i32
    %c8_i32 = arith.constant 8 : i32
    %1 = arith.muli %c0_i32, %c8_i32 : i32
    %2 = tpu.assume_multiple %1, 8 : i32
    %c0 = arith.constant 0 : index
    %3 = arith.index_cast %2 : i32 to index
    %c0_0 = arith.constant 0 : index
    %4 = vector.load %arg1[%c0, %3, %c0_0] : memref<1x8x128xf32, #tpu.memory_space<vmem>>, vector<1x8x128xf32>
    %5 = vector.shape_cast %4 : vector<1x8x128xf32> to vector<8x128xf32>
    %c0_1 = arith.constant 0 : index
    %6 = memref.load %arg5[%c0_1] : memref<1xf32, #tpu.memory_space<smem>>
    %7 = vector.broadcast %6 : f32 to vector<8x1xf32>
    %c0_2 = arith.constant 0 : index
    %c0_3 = arith.constant 0 : index
    %8 = vector.load %arg2[%c0_2, %c0_3] : memref<128x128xf32, #tpu.memory_space<vmem>>, vector<128x128xf32>
    %cst_4 = arith.constant dense<0.000000e+00> : vector<8x128xf32>
    %9 = tpu.matmul %5, %8, %cst_4 {dimension_numbers = #tpu.dot_dimension_numbers<[1], [0], [0], [1], [0, 0, 1, 1], [], []>} : vector<8x128xf32>, vector<128x128xf32>, vector<8x128xf32> -> vector<8x128xf32>
    %c0_5 = arith.constant 0 : index
    %c0_6 = arith.constant 0 : index
    %10 = vector.load %arg3[%c0_5, %c0_6] : memref<1x128xf32, #tpu.memory_space<vmem>>, vector<1x128xf32>
    %11 = vector.broadcast %10 : vector<1x128xf32> to vector<8x128xf32>
    %12 = arith.addf %9, %11 : vector<8x128xf32>
    %13 = math.tanh %12 : vector<8x128xf32>
    %c0_7 = arith.constant 0 : index
    %c0_8 = arith.constant 0 : index
    %14 = vector.load %arg4[%c0_7, %c0_8] : memref<1x128xf32, #tpu.memory_space<vmem>>, vector<1x128xf32>
    %15 = vector.broadcast %14 : vector<1x128xf32> to vector<8x128xf32>
    %16 = arith.mulf %13, %15 : vector<8x128xf32>
    %cst_9 = arith.constant dense<0.000000e+00> : vector<8xf32>
    %17 = vector.multi_reduction <add>, %16, %cst_9 [1] : vector<8x128xf32> to vector<8xf32>
    %18 = vector.shape_cast %17 : vector<8xf32> to vector<8x1xf32>
    %19 = arith.addf %7, %18 : vector<8x1xf32>
    %20 = arith.negf %19 : vector<8x1xf32>
    %21 = math.exp %20 : vector<8x1xf32>
    %cst_10 = arith.constant 1.000000e+00 : f32
    %22 = vector.broadcast %cst_10 : f32 to vector<8x1xf32>
    %23 = arith.addf %22, %21 : vector<8x1xf32>
    %24 = arith.divf %22, %23 : vector<8x1xf32>
    %25 = arith.index_cast %2 : i32 to index
    %c0_11 = arith.constant 0 : index
    %26 = vector.load %arg7[%25, %c0_11] : memref<8x1xf32, #tpu.memory_space<vmem>>, vector<8x1xf32>
    tpu.vector_store %arg7[%25, %c0_11], %24 {strides = array<i32>} : memref<8x1xf32, #tpu.memory_space<vmem>>, vector<8x1xf32>,
    %27 = vector.shape_cast %24 : vector<8x1xf32> to vector<1x8x1xf32>
    %cst_12 = arith.constant dense<0.000000e+00> : vector<1xf32>
    %28 = vector.multi_reduction <add>, %27, %cst_12 [1, 2] : vector<1x8x1xf32> to vector<1xf32>
    %29 = vector.shape_cast %28 : vector<1xf32> to vector<1x1x1xf32>
    %30 = vector.extract %29[0, 0, 0] : f32 from vector<1x1x1xf32>
    %31 = vector.broadcast %30 : f32 to vector<1x1xf32>
    %32 = arith.addf %0, %31 : vector<1x1xf32>
    %c1_i32 = arith.constant 1 : i32
    %33 = tpu.reciprocal %32 {approx = true} : vector<1x1xf32> -> vector<1x1xf32>
    %c0_i32_13 = arith.constant 0 : i32
    %c8_i32_14 = arith.constant 8 : i32
    %34 = arith.muli %c0_i32_13, %c8_i32_14 : i32
    %35 = tpu.assume_multiple %34, 8 : i32
    %36 = arith.index_cast %35 : i32 to index
    %c0_15 = arith.constant 0 : index
    %37 = vector.load %arg7[%36, %c0_15] : memref<8x1xf32, #tpu.memory_space<vmem>>, vector<8x1xf32>
    %38 = vector.broadcast %33 : vector<1x1xf32> to vector<8x1xf32>
    %39 = arith.mulf %37, %38 : vector<8x1xf32>
    %c0_16 = arith.constant 0 : index
    %40 = arith.index_cast %35 : i32 to index
    %c0_17 = arith.constant 0 : index
    %41 = vector.load %arg1[%c0_16, %40, %c0_17] : memref<1x8x128xf32, #tpu.memory_space<vmem>>, vector<1x8x128xf32>
    %42 = vector.shape_cast %41 : vector<1x8x128xf32> to vector<8x128xf32>
    %43 = vector.broadcast %39 : vector<8x1xf32> to vector<8x128xf32>
    %44 = arith.mulf %42, %43 : vector<8x128xf32>
    %c0_18 = arith.constant 0 : index
    %45 = arith.index_cast %35 : i32 to index
    %c0_19 = arith.constant 0 : index
    %46 = vector.load %arg6[%c0_18, %45, %c0_19] : memref<1x8x128xf32, #tpu.memory_space<vmem>>, vector<1x8x128xf32>
    %47 = vector.shape_cast %46 : vector<1x8x128xf32> to vector<8x128xf32>
    %48 = vector.shape_cast %44 : vector<8x128xf32> to vector<1x8x128xf32>
    tpu.vector_store %arg6[%c0_18, %45, %c0_19], %48 {strides = array<i32>} : memref<1x8x128xf32, #tpu.memory_space<vmem>>, vector<1x8x128xf32>,
    %c1_i32_20 = arith.constant 1 : i32
    return
  }
  func.func @transform_0(%arg0: i32) -> (i32, i32, i32) {
    %c0_i32 = arith.constant 0 : i32
    %c0_i32_0 = arith.constant 0 : i32
    %c0_i32_1 = arith.constant 0 : i32
    return %arg0, %c0_i32, %c0_i32_0 : i32, i32, i32
  }
  func.func @transform_1(%arg0: i32) -> (i32, i32) {
    %c0_i32 = arith.constant 0 : i32
    %c0_i32_0 = arith.constant 0 : i32
    %c0_i32_1 = arith.constant 0 : i32
    return %c0_i32, %c0_i32_0 : i32, i32
  }
  func.func @transform_2(%arg0: i32) -> (i32, i32) {
    %c0_i32 = arith.constant 0 : i32
    %c0_i32_0 = arith.constant 0 : i32
    %c0_i32_1 = arith.constant 0 : i32
    return %c0_i32, %c0_i32_0 : i32, i32
  }
  func.func @transform_3(%arg0: i32) -> (i32, i32) {
    %c0_i32 = arith.constant 0 : i32
    %c0_i32_0 = arith.constant 0 : i32
    %c0_i32_1 = arith.constant 0 : i32
    return %c0_i32, %c0_i32_0 : i32, i32
  }
  func.func @transform_4(%arg0: i32) -> i32 {
    %c0_i32 = arith.constant 0 : i32
    %c0_i32_0 = arith.constant 0 : i32
    return %c0_i32 : i32
  }
  func.func @transform_5(%arg0: i32) -> (i32, i32, i32) {
    %c0_i32 = arith.constant 0 : i32
    %c0_i32_0 = arith.constant 0 : i32
    %c0_i32_1 = arith.constant 0 : i32
    return %arg0, %c0_i32, %c0_i32_0 : i32, i32, i32
  }
}

</mosaic_0001>

<llo_original>
// kernel: tpu_custom_call.1
$region0: #{tpu_custom_call.1}
  #allocation0 [shape = 'u32[]', space=smem, size = 0x4, offset = 0x4, fixed_abs, tag = 'smem constant byte address 0x4 - core index']
  #allocation1 [shape = 'u32[144,128]{1,0:T(1,128)}', space=vmem, size = 0x12000, scoped, tag = 'internal scratch']
  #allocation2 [shape = 'f32[8,1]{1,0:T(8,128)}', space=vmem, size = 0x1000, scoped, tag = 'scratch operand']
  #allocation3 [shape = 'f32[1]{0:T(128)S(6)}', space=smem, size = 0x200, scoped, tag = 'scoped memory for tpu_custom_call.1']
  %s0 = inlined_call_operand.hbm [shape: f32[2,8,128], index: 0, kind: input, shape index: {}]
  %s1 = inlined_call_operand.hbm [shape: f32[128,128], index: 1, kind: input, shape index: {}]
  %s2 = inlined_call_operand.vmem [shape: f32[1,128], index: 2, kind: input, shape index: {}]
  %s3 = inlined_call_operand.vmem [shape: f32[1,128], index: 3, kind: input, shape index: {}]
  %s4 = inlined_call_operand.<no memory space> [shape: f32[1], index: 4, kind: input, shape index: {}]
  %s5 = inlined_call_operand.hbm [shape: f32[2,8,128], index: 5, kind: output, shape index: {}]
  %s6 = sld [smem:[#allocation0]]
  $region61: #{tpu_custom_call.1} parent=0
    _
  %s8 = ssub.s32 1, %s6
  %s9 = scalar_select 0, %s8, %s6
  %10 = sst [smem:[#allocation3]] %s4
  $region1: #{tpu_custom_call.1} parent=0
    #allocation4 [shape = 'u8[8192]{0}', space=vmem, size = 0x2000, scoped, tag = 'input window, operand 0']
    #allocation5 [shape = 's32[2]{0}', space=sflag, size = 0x8, scoped, tag = 'scoped memory for tpu_custom_call.1']
    #allocation6 [shape = 's32[2]{0}', space=sflag, size = 0x8, scoped, tag = 'scoped memory for tpu_custom_call.1']
    #allocation7 [shape = 'u8[65536]{0}', space=vmem, size = 0x10000, scoped, tag = 'input window, operand 1, single buffered']
    #allocation8 [shape = 's32[1]{0}', space=sflag, size = 0x4, scoped, tag = 'scoped memory for tpu_custom_call.1']
    #allocation9 [shape = 'u8[8192]{0}', space=vmem, size = 0x2000, scoped, tag = 'output window, operand 0']
    %11 = vsyncpa [#allocation5], 0
    %s12 = scalar_lea.sflag [#allocation5], 1
    %13 = vsyncpa %s12, 0
    %14 = vsyncpa [#allocation8], 0
    %15 = vsyncpa [#allocation6], 0
    %s16 = scalar_lea.sflag [#allocation6], 1
    %17 = vsyncpa %s16, 0
    loop: start=0, step=1, limit=4
    $region2: #{tpu_custom_call.1} parent=1 // loop_pre_header
      _
    $region3: #{tpu_custom_call.1} parent=1 // loop_header
      %s19 = sphi 0, %s23
      %p20 = scmp.ge.s32.totalorder %s19, 4
      %s29 = sphi 0, %s31
      %s32 = sphi 0, %s29
      %s33 = sphi 0, %s32
      %s49 = sphi 0, %s33
      %s53 = sphi 0, %s53
      %s55 = sphi 0, %s53
      %s56 = sphi 0, %s55
      %s70 = sphi 0, %s56
      %s74 = sphi 0, %s74
      %s76 = sphi 0, %s74
      %s77 = sphi 0, %s76
      %s91 = sphi 0, %s77
      %s95 = sphi 0, %s95
      %s97 = sphi 0, %s95
      %s98 = sphi 0, %s97
      %s112 = sphi 0, %s98
      %s116 = sphi 0, %s116
      %s118 = sphi 0, %s116
      %s119 = sphi 0, %s118
      %s133 = sphi 0, %s119
      %s139 = sphi 0, %s141
      %s142 = sphi 0, %s139
      %s143 = sphi 0, %s142
      %s159 = sphi 0, %s143
    $region4: #{tpu_custom_call.1} parent=1 // loop_header_branch
      %22 = sbr.rel (%p20) target = $region8
    $region5: #{tpu_custom_call.1} parent=1 // loop_body
      %s24 = ssub.s32 %s19, 1
      %s25 = ssub.s32 %s19, 2
      %s26 = sadd.s32 %s19, 1
      %s27 = ssub.s32 %s19, %s26
      %p28 = scmp.eq.s32.totalorder %s27, 0
      %s30 = sadd.s32 %s29, 1
      %s31 = scalar_select %p28, %s29, %s30
      %p34 = pneg %p28
      %p35 = scmp.eq.s32.totalorder %s19, 1
      %p36 = por %p34, %p35
      %p37 = scmp.ne.s32.totalorder %s29, %s32
      %p38 = scmp.eq.s32.totalorder %s19, 0
      %p39 = por %p37, %p38
      %p40 = scmp.ne.s32.totalorder %s29, %s32
      %p41 = scmp.eq.s32.totalorder %s24, 1
      %p42 = por %p40, %p41
      %p43 = scmp.ne.s32.totalorder %s32, %s33
      %p44 = scmp.eq.s32.totalorder %s24, 0
      %p45 = por %p43, %p44
      %p46 = scmp.ne.s32.totalorder %s32, %s33
      %p47 = scmp.eq.s32.totalorder %s25, 1
      %p48 = por %p46, %p47
      %p50 = scmp.ne.s32.totalorder %s33, %s49
      %p51 = scmp.eq.s32.totalorder %s25, 0
      %p52 = por %p50, %p51
      %s54 = sadd.s32 %s53, 1
      %p57 = scmp.eq.s32.totalorder %s19, 1
      %p58 = scmp.ne.s32.totalorder %s53, %s55
      %p59 = scmp.eq.s32.totalorder %s19, 0
      %p60 = por %p58, %p59
      %p61 = scmp.ne.s32.totalorder %s53, %s55
      %p62 = scmp.eq.s32.totalorder %s24, 1
      %p63 = por %p61, %p62
      %p64 = scmp.ne.s32.totalorder %s55, %s56
      %p65 = scmp.eq.s32.totalorder %s24, 0
      %p66 = por %p64, %p65
      %p67 = scmp.ne.s32.totalorder %s55, %s56
      %p68 = scmp.eq.s32.totalorder %s25, 1
      %p69 = por %p67, %p68
      %p71 = scmp.ne.s32.totalorder %s56, %s70
      %p72 = scmp.eq.s32.totalorder %s25, 0
      %p73 = por %p71, %p72
      %s75 = sadd.s32 %s74, 1
      %p78 = scmp.eq.s32.totalorder %s19, 1
      %p79 = scmp.ne.s32.totalorder %s74, %s76
      %p80 = scmp.eq.s32.totalorder %s19, 0
      %p81 = por %p79, %p80
      %p82 = scmp.ne.s32.totalorder %s74, %s76
      %p83 = scmp.eq.s32.totalorder %s24, 1
      %p84 = por %p82, %p83
      %p85 = scmp.ne.s32.totalorder %s76, %s77
      %p86 = scmp.eq.s32.totalorder %s24, 0
      %p87 = por %p85, %p86
      %p88 = scmp.ne.s32.totalorder %s76, %s77
      %p89 = scmp.eq.s32.totalorder %s25, 1
      %p90 = por %p88, %p89
      %p92 = scmp.ne.s32.totalorder %s77, %s91
      %p93 = scmp.eq.s32.totalorder %s25, 0
      %p94 = por %p92, %p93
      %s96 = sadd.s32 %s95, 1
      %p99 = scmp.eq.s32.totalorder %s19, 1
      %p100 = scmp.ne.s32.totalorder %s95, %s97
      %p101 = scmp.eq.s32.totalorder %s19, 0
      %p102 = por %p100, %p101
      %p103 = scmp.ne.s32.totalorder %s95, %s97
      %p104 = scmp.eq.s32.totalorder %s24, 1
      %p105 = por %p103, %p104
      %p106 = scmp.ne.s32.totalorder %s97, %s98
      %p107 = scmp.eq.s32.totalorder %s24, 0
      %p108 = por %p106, %p107
      %p109 = scmp.ne.s32.totalorder %s97, %s98
      %p110 = scmp.eq.s32.totalorder %s25, 1
      %p111 = por %p109, %p110
      %p113 = scmp.ne.s32.totalorder %s98, %s112
      %p114 = scmp.eq.s32.totalorder %s25, 0
      %p115 = por %p113, %p114
      %s117 = sadd.s32 %s116, 1
      %p120 = scmp.eq.s32.totalorder %s19, 1
      %p121 = scmp.ne.s32.totalorder %s116, %s118
      %p122 = scmp.eq.s32.totalorder %s19, 0
      %p123 = por %p121, %p122
      %p124 = scmp.ne.s32.totalorder %s116, %s118
      %p125 = scmp.eq.s32.totalorder %s24, 1
      %p126 = por %p124, %p125
      %p127 = scmp.ne.s32.totalorder %s118, %s119
      %p128 = scmp.eq.s32.totalorder %s24, 0
      %p129 = por %p127, %p128
      %p130 = scmp.ne.s32.totalorder %s118, %s119
      %p131 = scmp.eq.s32.totalorder %s25, 1
      %p132 = por %p130, %p131
      %p134 = scmp.ne.s32.totalorder %s119, %s133
      %p135 = scmp.eq.s32.totalorder %s25, 0
      %p136 = por %p134, %p135
      %s137 = ssub.s32 %s19, %s26
      %p138 = scmp.eq.s32.totalorder %s137, 0
      %s140 = sadd.s32 %s139, 1
      %s141 = scalar_select %p138, %s139, %s140
      %p144 = pneg %p138
      %p145 = scmp.eq.s32.totalorder %s19, 1
      %p146 = por %p144, %p145
      %p147 = scmp.ne.s32.totalorder %s139, %s142
      %p148 = scmp.eq.s32.totalorder %s19, 0
      %p149 = por %p147, %p148
      %p150 = scmp.ne.s32.totalorder %s139, %s142
      %p151 = scmp.eq.s32.totalorder %s24, 1
      %p152 = por %p150, %p151
      %p153 = scmp.ne.s32.totalorder %s142, %s143
      %p154 = scmp.eq.s32.totalorder %s24, 0
      %p155 = por %p153, %p154
      %p156 = scmp.ne.s32.totalorder %s142, %s143
      %p157 = scmp.eq.s32.totalorder %s25, 1
      %p158 = por %p156, %p157
      %p160 = scmp.ne.s32.totalorder %s143, %s159
      %p161 = scmp.eq.s32.totalorder %s25, 0
      %p162 = por %p160, %p161
      %p163 = scmp.le.s32.totalorder 1, %s19
      %p164 = scmp.lt.s32.totalorder %s19, 3
      %p165 = pnand %p163, %p164
      %p166 = pneg %p165
      // Predicated region
      $region9: #{tpu_custom_call.1} parent=5 // pred_check
        _
      $region10: #{tpu_custom_call.1} parent=5 // pred_check_branch
        %168 = sbr.rel (%p165) target = $region12
      $region11: #{tpu_custom_call.1} parent=5 // pred_region
        %s169 = ssub.s32 %s19, 1
        // Predicated region
        $region13: #{tpu_custom_call.1} parent=11 // pred_check
          %p170 = pneg %p66
        $region14: #{tpu_custom_call.1} parent=11 // pred_check_branch
          %172 = sbr.rel (%p170) target = $region16
        $region15: #{tpu_custom_call.1} parent=11 // pred_region
          %s174 = ssub.s32 2048, 2048
          %175 = vsyncadd [#allocation8], %s174
          %s176 = sshll.u32 [#allocation7], 4
          %s177 = int_to_ptr.vmem [resolvable:$true] %s176
          %182 = dma.hbm_to_vmem [thread:$0]  %s1, 2048, %s177, [#allocation8], 128, 128, 8
        $region16: #{tpu_custom_call.1} parent=11 // pred_fallthru
          _
        // Predicated region
        $region17: #{tpu_custom_call.1} parent=11 // pred_check
          %p183 = pneg %p87
        $region18: #{tpu_custom_call.1} parent=11 // pred_check_branch
          %185 = sbr.rel (%p183) target = $region20
        $region19: #{tpu_custom_call.1} parent=11 // pred_region
          _
        $region20: #{tpu_custom_call.1} parent=11 // pred_fallthru
          _
        // Predicated region
        $region21: #{tpu_custom_call.1} parent=11 // pred_check
          %p186 = pneg %p108
        $region22: #{tpu_custom_call.1} parent=11 // pred_check_branch
          %188 = sbr.rel (%p186) target = $region24
        $region23: #{tpu_custom_call.1} parent=11 // pred_region
          _
        $region24: #{tpu_custom_call.1} parent=11 // pred_fallthru
          _
        // Predicated region
        $region25: #{tpu_custom_call.1} parent=11 // pred_check
          %p189 = pneg %p129
        $region26: #{tpu_custom_call.1} parent=11 // pred_check_branch
          %191 = sbr.rel (%p189) target = $region28
        $region27: #{tpu_custom_call.1} parent=11 // pred_region
          _
        $region28: #{tpu_custom_call.1} parent=11 // pred_fallthru
          _
      $region12: #{tpu_custom_call.1} parent=5 // pred_fallthru
        _
      %p192 = scmp.lt.s32.totalorder %s19, 2
      // Predicated region
      $region29: #{tpu_custom_call.1} parent=5 // pred_check
        %p193 = pneg %p192
      $region30: #{tpu_custom_call.1} parent=5 // pred_check_branch
        %195 = sbr.rel (%p193) target = $region32
      $region31: #{tpu_custom_call.1} parent=5 // pred_region
        // Predicated region
        $region33: #{tpu_custom_call.1} parent=31 // pred_check
          %p196 = pneg %p39
        $region34: #{tpu_custom_call.1} parent=31 // pred_check_branch
          %198 = sbr.rel (%p196) target = $region36
        $region35: #{tpu_custom_call.1} parent=31 // pred_region
          %s199 = sand.u32 %s29, 1
          %s200 = scalar_lea.sflag [#allocation5], %s199
          %s201 = sand.u32 %s29, 1
          %s202 = smul.addr %s201, 8
          %s203 = scalar_lea.vmem [#allocation4], %s202
          %s205 = ssub.s32 128, 128
          %206 = vsyncadd %s200, %s205
          %s207 = smul.addr %s19, 128
          %s208 = scalar_lea.hbm %s0, %s207
          %s210 = sshll.u32 %s203, 4
          %s211 = int_to_ptr.vmem [resolvable:$true] %s210
          %213 = dma.hbm_to_vmem [thread:$0]  %s208, 128, %s211, %s200
        $region36: #{tpu_custom_call.1} parent=31 // pred_fallthru
          _
      $region32: #{tpu_custom_call.1} parent=5 // pred_fallthru
        _
      %p214 = scmp.le.s32.totalorder 1, %s19
      %p215 = scmp.lt.s32.totalorder %s19, 3
      %p216 = pnand %p214, %p215
      %p217 = pneg %p216
      // Predicated region
      $region37: #{tpu_custom_call.1} parent=5 // pred_check
        _
      $region38: #{tpu_custom_call.1} parent=5 // pred_check_branch
        %219 = sbr.rel (%p216) target = $region40
      $region39: #{tpu_custom_call.1} parent=5 // pred_region
        %s220 = ssub.s32 %s19, 1
        %s221 = sand.u32 %s32, 1
        %s222 = scalar_lea.sflag [#allocation5], %s221
        %s223 = sand.u32 %s32, 1
        %s224 = smul.addr %s223, 8
        %s225 = scalar_lea.vmem [#allocation4], %s224
        // Predicated region
        $region41: #{tpu_custom_call.1} parent=39 // pred_check
          %p226 = pneg %p45
        $region42: #{tpu_custom_call.1} parent=39 // pred_check_branch
          %228 = sbr.rel (%p226) target = $region44
        $region43: #{tpu_custom_call.1} parent=39 // pred_region
          %229 = dma.done %s222, 128
        $region44: #{tpu_custom_call.1} parent=39 // pred_fallthru
          _
        // Predicated region
        $region45: #{tpu_custom_call.1} parent=39 // pred_check
          %p230 = pneg %p66
        $region46: #{tpu_custom_call.1} parent=39 // pred_check_branch
          %232 = sbr.rel (%p230) target = $region48
        $region47: #{tpu_custom_call.1} parent=39 // pred_region
          %233 = dma.done [#allocation8], 2048
        $region48: #{tpu_custom_call.1} parent=39 // pred_fallthru
          _
        %s234 = sand.u32 %s32, 1
        %s235 = scalar_lea.sflag [#allocation5], %s234
        %s236 = sand.u32 %s32, 1
        %s237 = smul.addr %s236, 8
        %s238 = scalar_lea.vmem [#allocation4], %s237
        %p239 = pneg %p45
        %p240 = pneg %p42
        %p241 = pneg %p66
        %p242 = pneg %p63
        %p243 = pneg %p87
        %p244 = pneg %p84
        %p245 = pneg %p108
        %p246 = pneg %p105
        %p247 = pneg %p129
        %p248 = pneg %p126
        %p249 = pneg %p155
        %p250 = pneg %p152
        %s251 = sand.u32 %s142, 1
        %s252 = scalar_lea.sflag [#allocation6], %s251
        %s253 = sand.u32 %s142, 1
        %s254 = smul.addr %s253, 8
        %s255 = scalar_lea.vmem [#allocation9], %s254
        %v256 = vld [vmem:[%s225] sm:$0xff]
        %s257 = sld [smem:[#allocation3]]
        %v258 = vstv %s257
        %v259 = vld [vmem:[#allocation7] sm:$0xff]
        %v260 = vld [vmem:[#allocation7 + $0x8] sm:$0xff]
        %v261 = vld [vmem:[#allocation7 + $0x10] sm:$0xff]
        %v262 = vld [vmem:[#allocation7 + $0x18] sm:$0xff]
        %v263 = vld [vmem:[#allocation7 + $0x20] sm:$0xff]
        %v264 = vld [vmem:[#allocation7 + $0x28] sm:$0xff]
        %v265 = vld [vmem:[#allocation7 + $0x30] sm:$0xff]
        %v266 = vld [vmem:[#allocation7 + $0x38] sm:$0xff]
        %v267 = vld [vmem:[#allocation7 + $0x40] sm:$0xff]
        %v268 = vld [vmem:[#allocation7 + $0x48] sm:$0xff]
        %v269 = vld [vmem:[#allocation7 + $0x50] sm:$0xff]
        %v270 = vld [vmem:[#allocation7 + $0x58] sm:$0xff]
        %v271 = vld [vmem:[#allocation7 + $0x60] sm:$0xff]
        %v272 = vld [vmem:[#allocation7 + $0x68] sm:$0xff]
        %v273 = vld [vmem:[#allocation7 + $0x70] sm:$0xff]
        %v274 = vld [vmem:[#allocation7 + $0x78] sm:$0xff]
        %v275 = vld [vmem:[%s2] sm:$0x1]
        %v277 = vlaneseq
        %v278 = vshrl.u32 %v277, 7
        %v279 = vsub.s32 0, %v278
        %v280 = vrot.slane %v275, %v279
        %282 = vmatprep.subr.mxu0 0.0
        %283 = vmatpush1.msra.mxu0 %v259
        %284 = vmatprep.subr.mxu0 0.0
        %285 = vmatpush1.msra.mxu0 %v260
        %286 = vmatprep.subr.mxu0 0.0
        %287 = vmatpush1.msra.mxu0 %v261
        %288 = vmatprep.subr.mxu0 0.0
        %289 = vmatpush1.msra.mxu0 %v262
        %290 = vmatprep.subr.mxu0 0.0
        %291 = vmatpush1.msra.mxu0 %v263
        %292 = vmatprep.subr.mxu0 0.0
        %293 = vmatpush1.msra.mxu0 %v264
        %294 = vmatprep.subr.mxu0 0.0
        %295 = vmatpush1.msra.mxu0 %v265
        %296 = vmatprep.subr.mxu0 0.0
        %297 = vmatpush1.msra.mxu0 %v266
        %298 = vmatprep.subr.mxu0 0.0
        %299 = vmatpush1.msra.mxu0 %v267
        %300 = vmatprep.subr.mxu0 0.0
        %301 = vmatpush1.msra.mxu0 %v268
        %302 = vmatprep.subr.mxu0 0.0
        %303 = vmatpush1.msra.mxu0 %v269
        %304 = vmatprep.subr.mxu0 0.0
        %305 = vmatpush1.msra.mxu0 %v270
        %306 = vmatprep.subr.mxu0 0.0
        %307 = vmatpush1.msra.mxu0 %v271
        %308 = vmatprep.subr.mxu0 0.0
        %309 = vmatpush1.msra.mxu0 %v272
        %310 = vmatprep.subr.mxu0 0.0
        %311 = vmatpush1.msra.mxu0 %v273
        %312 = vmatprep.subr.mxu0 0.0
        %313 = vmatpush1.msra.mxu0 %v274
        %314 = vmatprep.subr.mxu0 0.0
        %315 = vmatpush1.msra.mxu0 0.0
        %316 = vmatprep.subr.mxu0 0.0
        %317 = vmatpush1.msra.mxu0 0.0
        %318 = vmatprep.subr.mxu0 0.0
        %319 = vmatpush1.msra.mxu0 0.0
        %320 = vmatprep.subr.mxu0 0.0
        %321 = vmatpush1.msra.mxu0 0.0
        %322 = vmatprep.subr.mxu0 0.0
        %323 = vmatpush1.msra.mxu0 0.0
        %324 = vmatprep.subr.mxu0 0.0
        %325 = vmatpush1.msra.mxu0 0.0
        %326 = vmatprep.subr.mxu0 0.0
        %327 = vmatpush1.msra.mxu0 0.0
        %328 = vmatprep.subr.mxu0 0.0
        %329 = vmatpush1.msra.mxu0 0.0
        %330 = vmatprep.subr.mxu0 0.0
        %331 = vmatpush1.msra.mxu0 0.0
        %332 = vmatprep.subr.mxu0 0.0
        %333 = vmatpush1.msra.mxu0 0.0
        %334 = vmatprep.subr.mxu0 0.0
        %335 = vmatpush1.msra.mxu0 0.0
        %336 = vmatprep.subr.mxu0 0.0
        %337 = vmatpush1.msra.mxu0 0.0
        %338 = vmatprep.subr.mxu0 0.0
        %339 = vmatpush1.msra.mxu0 0.0
        %340 = vmatprep.subr.mxu0 0.0
        %341 = vmatpush1.msra.mxu0 0.0
        %342 = vmatprep.subr.mxu0 0.0
        %343 = vmatpush1.msra.mxu0 0.0
        %344 = vmatprep.subr.mxu0 0.0
        %345 = vmatpush1.msra.mxu0 0.0
        %346 = vmatprep.mubr.f32.mxu0 0.0
        %347 = vmatmul.mubr.f32.gmra.mrb[0].mxu0 %v256
        %v348 = vpop.f32.mrb[0].mxu0
        %v349 = vadd.f32 %v280, %v348
        %v350 = vpop.f32.mrb[0].mxu0
        %351 = vdwg.mxu0
        %v352 = vtanh.pop %v349
        %v353 = vld [vmem:[%s3] sm:$0x1]
        %v355 = vlaneseq
        %v356 = vshrl.u32 %v355, 7
        %v357 = vsub.s32 0, %v356
        %v358 = vrot.slane %v353, %v357
        %v360 = vmul.f32 %v352, %v358
        %361 = vadd.xlane.f32.xlu0 %v360
        %v362 = vpop.xlane.xlu0 %361
        %v363 = vadd.f32 %v258, %v362
        %v364 = vxor.u32 %v363, 2147483648
        %v365 = vmul.f32 %v364, 1.442695
        %v366 = vpow.pop %v365
        %v367 = vadd.f32 %v366, 1.0
        %v368 = vrcp.pop %v367
        %v369 = vmul.f32 1.0, %v368
        %vm370 = vcmask 7168
        %371 = vst.msk [vmem:[#allocation2] sm:$0xff] %vm370, %v369
        %v372 = vsel %vm370, %v369, 0.0
        %373 = vadd.xlane.f32.xlu0 %v372
        %v374 = vpop.xlane.xlu0 %373
        %v375 = vrot.slane %v374, 4
        %v376 = vadd.f32 %v374, %v375
        %v377 = vrot.slane %v376, 2
        %v378 = vadd.f32 %v376, %v377
        %v379 = vrot.slane %v378, 1
        %v380 = vadd.f32 %v378, %v379
        %s381 = vtos %v380
        %v382 = vstv %s381
        %v383 = vadd.f32 %v382, 0.0
        %v384 = vrcp.pop %v383
        %v385 = vld [vmem:[#allocation2] sm:$0xff]
        %v386 = vmul.f32 %v385, %v384
        %v387 = vld [vmem:[%s225] sm:$0xff]
        %389 = vset.pattern.permute.xlu0 0
        %390 = vperm.xlu0 %389, %v386
        %v391 = vpop.permute.xlu0 %390
        %v393 = vmul.f32 %v387, %v391
        %394 = vst [vmem:[%s255] sm:$0xff] %v393
        %s395 = sand.u32 %s142, 1
        %s396 = scalar_lea.sflag [#allocation6], %s395
        %s397 = sand.u32 %s142, 1
        %s398 = smul.addr %s397, 8
        %s399 = scalar_lea.vmem [#allocation9], %s398
        // Predicated region
        $region49: #{tpu_custom_call.1} parent=39 // pred_check
          %p400 = pneg %p152
        $region50: #{tpu_custom_call.1} parent=39 // pred_check_branch
          %402 = sbr.rel (%p400) target = $region52
        $region51: #{tpu_custom_call.1} parent=39 // pred_region
          %s404 = ssub.s32 128, 128
          %405 = vsyncadd %s396, %s404
          %s406 = smul.addr %s24, 128
          %s407 = scalar_lea.hbm %s5, %s406
          %s409 = sshll.u32 %s399, 4
          %s410 = int_to_ptr.vmem [resolvable:$true] %s409
          %412 = dma.vmem_to_hbm [thread:$0]  %s410, 128, %s407, %s396
        $region52: #{tpu_custom_call.1} parent=39 // pred_fallthru
          _
      $region40: #{tpu_custom_call.1} parent=5 // pred_fallthru
        _
      %p413 = scmp.le.s32.totalorder 2, %s19
      // Predicated region
      $region53: #{tpu_custom_call.1} parent=5 // pred_check
        %p414 = pneg %p413
      $region54: #{tpu_custom_call.1} parent=5 // pred_check_branch
        %416 = sbr.rel (%p414) target = $region56
      $region55: #{tpu_custom_call.1} parent=5 // pred_region
        %s417 = ssub.s32 %s19, 2
        // Predicated region
        $region57: #{tpu_custom_call.1} parent=55 // pred_check
          %p418 = pneg %p158
        $region58: #{tpu_custom_call.1} parent=55 // pred_check_branch
          %420 = sbr.rel (%p418) target = $region60
        $region59: #{tpu_custom_call.1} parent=55 // pred_region
          %s421 = sand.u32 %s143, 1
          %s422 = scalar_lea.sflag [#allocation6], %s421
          %s423 = sand.u32 %s143, 1
          %s424 = smul.addr %s423, 8
          %s425 = scalar_lea.vmem [#allocation9], %s424
          %426 = dma.done %s422, 128
        $region60: #{tpu_custom_call.1} parent=55 // pred_fallthru
          _
      $region56: #{tpu_custom_call.1} parent=5 // pred_fallthru
        _
    $region6: #{tpu_custom_call.1} parent=1 // loop_footer
      %s23 = sadd.s32 1, %s19
    $region7: #{tpu_custom_call.1} parent=1 // loop_footer_branch
      %18 = sbr.rel target = $region3
    $region8: #{tpu_custom_call.1} parent=1 // loop_exit
      _
    %427 = vsyncpa [#allocation5], 1
    %s428 = scalar_lea.sflag [#allocation5], 1
    %429 = vsyncpa %s428, 1
    %430 = vsyncpa [#allocation8], 1
    %431 = vsyncpa [#allocation6], 1
    %s432 = scalar_lea.sflag [#allocation6], 1
    %433 = vsyncpa %s432, 1

</llo_original>
